<compile_context>
chip_gen: v7x
topology: tpu7x:2x2x1
jax: 0.10.0
libtpu: 0.0.40
codegen_flags: <defaults>
</compile_context>

<pallas_src>
import jax
import jax.numpy as jnp
from jax.experimental import pallas as pl
from jax.experimental.pallas import tpu as pltpu

EPS = 1e-5  # PyTorch nn.InstanceNorm2d default


def _instance_norm_branch(x, w, b):
    """x: (R, HW) f32 with R = N*C rows on sublanes.  w, b: (R, 1) f32."""
    hw = x.shape[-1]
    inv_hw = jnp.float32(1.0 / hw)
    # Single-pass statistics: two independent XLU lane reductions.
    s1 = jnp.sum(x, axis=-1, keepdims=True)          # sum(x)
    s2 = jnp.sum(x * x, axis=-1, keepdims=True)      # sum(x^2)
    mean = s1 * inv_hw
    var = s2 * inv_hw - mean * mean                  # biased variance
    inv = jax.lax.rsqrt(var + EPS)                   # EUP rsqrt
    scale = inv * w                                  # fold inv-std with affine weight
    shift = b - mean * scale                         # fold mean subtraction with bias
    return x * scale + shift                         # one multiply-add per element


def _insnorm_parallel_kernel(x0_ref, x1_ref, w0_ref, b0_ref, w1_ref, b1_ref,
                             o0_ref, o1_ref):
    # Branch 0 (insnorm_0) and branch 1 (insnorm_1), fused in one invocation.
    o0_ref[...] = _instance_norm_branch(
        x0_ref[...], w0_ref[...], b0_ref[...]).astype(o0_ref.dtype)
    o1_ref[...] = _instance_norm_branch(
        x1_ref[...], w1_ref[...], b1_ref[...]).astype(o1_ref.dtype)


def instance_norm_2d_parallel(x0, x1, w0, b0, w1, b1):
    """x0, x1: (N, C, H, W) f32.  w_i, b_i: (C,) f32.  Returns (y0, y1) NCHW."""
    N, C, H, W = x0.shape
    HW = H * W
    R = N * C

    # Contiguous reshapes only — no transposes, no extra HBM traffic.
    # Row r = n*C + c, spatial axis (HW) stays last -> lane-dense.
    x0f = x0.reshape(R, HW)
    x1f = x1.reshape(R, HW)
    # Per-row affine params: tile the (C,) vectors over N -> (N*C, 1), so the
    # in-kernel broadcast along lanes is free and sublanes are fully used.
    w0r = jnp.tile(w0.astype(jnp.float32), (N,)).reshape(R, 1)
    b0r = jnp.tile(b0.astype(jnp.float32), (N,)).reshape(R, 1)
    w1r = jnp.tile(w1.astype(jnp.float32), (N,)).reshape(R, 1)
    b1r = jnp.tile(b1.astype(jnp.float32), (N,)).reshape(R, 1)

    vmem = pl.BlockSpec(memory_space=pltpu.MemorySpace.VMEM)

    y0f, y1f = pl.pallas_call(
        _insnorm_parallel_kernel,
        out_shape=(jax.ShapeDtypeStruct((R, HW), jnp.float32),
                   jax.ShapeDtypeStruct((R, HW), jnp.float32)),
        in_specs=[vmem, vmem, vmem, vmem, vmem, vmem],
        out_specs=(vmem, vmem),
        # Shape/dtype preserving op: let y0 reuse x0's buffer and y1 reuse x1's
        # when the caller's inputs are dead after the call.
        input_output_aliases={0: 0, 1: 1},
    )(x0f, x1f, w0r, b0r, w1r, b1r)

    return y0f.reshape(N, C, H, W), y1f.reshape(N, C, H, W)


if __name__ == "__main__":
    # Module config: InstanceNorm2dParallel(num_features=4), two parallel inputs.
    N, C, H, W = 2, 4, 16, 16

    key = jax.random.PRNGKey(0)
    ks = jax.random.split(key, 6)

    x0 = jax.random.normal(ks[0], (N, C, H, W), jnp.float32)
    x1 = jax.random.normal(ks[1], (N, C, H, W), jnp.float32)
    # affine params (PyTorch default init is weight=1, bias=0; randomize to
    # actually exercise the affine path)
    w0 = 1.0 + 0.1 * jax.random.normal(ks[2], (C,), jnp.float32)
    b0 = 0.1 * jax.random.normal(ks[3], (C,), jnp.float32)
    w1 = 1.0 + 0.1 * jax.random.normal(ks[4], (C,), jnp.float32)
    b1 = 0.1 * jax.random.normal(ks[5], (C,), jnp.float32)

    y0, y1 = instance_norm_2d_parallel(x0, x1, w0, b0, w1, b1)
    jax.block_until_ready((y0, y1))

    # Pure-JAX reference (training-mode InstanceNorm2d, biased variance).
    def ref(x, w, b):
        m = jnp.mean(x, axis=(2, 3), keepdims=True)
        v = jnp.mean((x - m) ** 2, axis=(2, 3), keepdims=True)
        return (x - m) / jnp.sqrt(v + EPS) * w.reshape(1, C, 1, 1) \
            + b.reshape(1, C, 1, 1)

    assert y0.shape == (N, C, H, W) and y1.shape == (N, C, H, W)
    assert jnp.allclose(y0, ref(x0, w0, b0), atol=1e-4, rtol=1e-4)
    assert jnp.allclose(y1, ref(x1, w1, b1), atol=1e-4, rtol=1e-4)
    print("KERNEL_OK")
</pallas_src>

<mosaic_0001>
module attributes {stable_mosaic.version = 11 : i64} {
  func.func @_insnorm_parallel_kernel(%arg0: memref<8x256xf32, #tpu.memory_space<vmem>>, %arg1: memref<8x256xf32, #tpu.memory_space<vmem>>, %arg2: memref<8x1xf32, #tpu.memory_space<vmem>>, %arg3: memref<8x1xf32, #tpu.memory_space<vmem>>, %arg4: memref<8x1xf32, #tpu.memory_space<vmem>>, %arg5: memref<8x1xf32, #tpu.memory_space<vmem>>, %arg6: memref<8x256xf32, #tpu.memory_space<vmem>>, %arg7: memref<8x256xf32, #tpu.memory_space<vmem>>) attributes {dimension_semantics = [], scalar_prefetch = 0 : i64, scratch_operands = 0 : i64, tpu.core_type = #tpu.core_type<tc>} {
    %c0 = arith.constant 0 : index
    %c0_0 = arith.constant 0 : index
    %0 = vector.load %arg0[%c0, %c0_0] : memref<8x256xf32, #tpu.memory_space<vmem>>, vector<8x256xf32>
    %c0_1 = arith.constant 0 : index
    %c0_2 = arith.constant 0 : index
    %1 = vector.load %arg2[%c0_1, %c0_2] : memref<8x1xf32, #tpu.memory_space<vmem>>, vector<8x1xf32>
    %c0_3 = arith.constant 0 : index
    %c0_4 = arith.constant 0 : index
    %2 = vector.load %arg3[%c0_3, %c0_4] : memref<8x1xf32, #tpu.memory_space<vmem>>, vector<8x1xf32>
    %cst = arith.constant dense<0.000000e+00> : vector<8xf32>
    %3 = vector.multi_reduction <add>, %0, %cst [1] : vector<8x256xf32> to vector<8xf32>
    %4 = vector.shape_cast %3 : vector<8xf32> to vector<8x1xf32>
    %5 = arith.mulf %0, %0 : vector<8x256xf32>
    %cst_5 = arith.constant dense<0.000000e+00> : vector<8xf32>
    %6 = vector.multi_reduction <add>, %5, %cst_5 [1] : vector<8x256xf32> to vector<8xf32>
    %7 = vector.shape_cast %6 : vector<8xf32> to vector<8x1xf32>
    %cst_6 = arith.constant 3.906250e-03 : f32
    %8 = vector.broadcast %cst_6 : f32 to vector<8x1xf32>
    %9 = arith.mulf %4, %8 : vector<8x1xf32>
    %cst_7 = arith.constant 3.906250e-03 : f32
    %10 = vector.broadcast %cst_7 : f32 to vector<8x1xf32>
    %11 = arith.mulf %7, %10 : vector<8x1xf32>
    %12 = arith.mulf %9, %9 : vector<8x1xf32>
    %13 = arith.subf %11, %12 : vector<8x1xf32>
    %cst_8 = arith.constant 9.99999974E-6 : f32
    %14 = vector.broadcast %cst_8 : f32 to vector<8x1xf32>
    %15 = arith.addf %13, %14 : vector<8x1xf32>
    %16 = math.rsqrt %15 : vector<8x1xf32>
    %17 = arith.mulf %16, %1 : vector<8x1xf32>
    %18 = arith.mulf %9, %17 : vector<8x1xf32>
    %19 = arith.subf %2, %18 : vector<8x1xf32>
    %20 = vector.broadcast %17 : vector<8x1xf32> to vector<8x256xf32>
    %21 = arith.mulf %0, %20 : vector<8x256xf32>
    %22 = vector.broadcast %19 : vector<8x1xf32> to vector<8x256xf32>
    %23 = arith.addf %21, %22 : vector<8x256xf32>
    %c0_9 = arith.constant 0 : index
    %c0_10 = arith.constant 0 : index
    %24 = vector.load %arg6[%c0_9, %c0_10] : memref<8x256xf32, #tpu.memory_space<vmem>>, vector<8x256xf32>
    tpu.vector_store %arg6[%c0_9, %c0_10], %23 {strides = array<i32>} : memref<8x256xf32, #tpu.memory_space<vmem>>, vector<8x256xf32>,
    %c0_11 = arith.constant 0 : index
    %c0_12 = arith.constant 0 : index
    %25 = vector.load %arg1[%c0_11, %c0_12] : memref<8x256xf32, #tpu.memory_space<vmem>>, vector<8x256xf32>
    %c0_13 = arith.constant 0 : index
    %c0_14 = arith.constant 0 : index
    %26 = vector.load %arg4[%c0_13, %c0_14] : memref<8x1xf32, #tpu.memory_space<vmem>>, vector<8x1xf32>
    %c0_15 = arith.constant 0 : index
    %c0_16 = arith.constant 0 : index
    %27 = vector.load %arg5[%c0_15, %c0_16] : memref<8x1xf32, #tpu.memory_space<vmem>>, vector<8x1xf32>
    %cst_17 = arith.constant dense<0.000000e+00> : vector<8xf32>
    %28 = vector.multi_reduction <add>, %25, %cst_17 [1] : vector<8x256xf32> to vector<8xf32>
    %29 = vector.shape_cast %28 : vector<8xf32> to vector<8x1xf32>
    %30 = arith.mulf %25, %25 : vector<8x256xf32>
    %cst_18 = arith.constant dense<0.000000e+00> : vector<8xf32>
    %31 = vector.multi_reduction <add>, %30, %cst_18 [1] : vector<8x256xf32> to vector<8xf32>
    %32 = vector.shape_cast %31 : vector<8xf32> to vector<8x1xf32>
    %cst_19 = arith.constant 3.906250e-03 : f32
    %33 = vector.broadcast %cst_19 : f32 to vector<8x1xf32>
    %34 = arith.mulf %29, %33 : vector<8x1xf32>
    %cst_20 = arith.constant 3.906250e-03 : f32
    %35 = vector.broadcast %cst_20 : f32 to vector<8x1xf32>
    %36 = arith.mulf %32, %35 : vector<8x1xf32>
    %37 = arith.mulf %34, %34 : vector<8x1xf32>
    %38 = arith.subf %36, %37 : vector<8x1xf32>
    %cst_21 = arith.constant 9.99999974E-6 : f32
    %39 = vector.broadcast %cst_21 : f32 to vector<8x1xf32>
    %40 = arith.addf %38, %39 : vector<8x1xf32>
    %41 = math.rsqrt %40 : vector<8x1xf32>
    %42 = arith.mulf %41, %26 : vector<8x1xf32>
    %43 = arith.mulf %34, %42 : vector<8x1xf32>
    %44 = arith.subf %27, %43 : vector<8x1xf32>
    %45 = vector.broadcast %42 : vector<8x1xf32> to vector<8x256xf32>
    %46 = arith.mulf %25, %45 : vector<8x256xf32>
    %47 = vector.broadcast %44 : vector<8x1xf32> to vector<8x256xf32>
    %48 = arith.addf %46, %47 : vector<8x256xf32>
    %c0_22 = arith.constant 0 : index
    %c0_23 = arith.constant 0 : index
    %49 = vector.load %arg7[%c0_22, %c0_23] : memref<8x256xf32, #tpu.memory_space<vmem>>, vector<8x256xf32>
    tpu.vector_store %arg7[%c0_22, %c0_23], %48 {strides = array<i32>} : memref<8x256xf32, #tpu.memory_space<vmem>>, vector<8x256xf32>,
    return
  }
}

</mosaic_0001>

<llo_original>
// kernel: tpu_custom_call.1
$region0: #{tpu_custom_call.1}
  #allocation0 [shape = 'u32[]', space=smem, size = 0x4, offset = 0x4, fixed_abs, tag = 'smem constant byte address 0x4 - core index']
  #allocation1 [shape = 'u32[144,128]{1,0:T(1,128)}', space=vmem, size = 0x12000, scoped, tag = 'internal scratch']
  %s0 = inlined_call_operand.hbm [shape: f32[8,256], index: 0, kind: input, shape index: {}, may-alias: {0,6}]
  %s1 = inlined_call_operand.hbm [shape: f32[8,256], index: 1, kind: input, shape index: {}, may-alias: {1,7}]
  %s2 = inlined_call_operand.vmem [shape: f32[8,1], index: 2, kind: input, shape index: {}]
  %s3 = inlined_call_operand.vmem [shape: f32[8,1], index: 3, kind: input, shape index: {}]
  %s4 = inlined_call_operand.vmem [shape: f32[8,1], index: 4, kind: input, shape index: {}]
  %s5 = inlined_call_operand.vmem [shape: f32[8,1], index: 5, kind: input, shape index: {}]
  %s6 = inlined_call_operand.hbm [shape: f32[8,256], index: 6, kind: output, shape index: {0}, may-alias: {0,6}]
  %s7 = inlined_call_operand.hbm [shape: f32[8,256], index: 7, kind: output, shape index: {1}, may-alias: {1,7}]
  %8 = xla_tuple %s6, %s7
  %s9 = sld [smem:[#allocation0]]
  $region50: #{tpu_custom_call.1} parent=0
    _
  %s11 = ssub.s32 1, %s9
  %s12 = scalar_select 0, %s11, %s9
  $region1: #{tpu_custom_call.1} parent=0
    #allocation2 [shape = 'u8[8192]{0}', space=vmem, size = 0x2000, scoped, tag = 'input window, operand 0, single buffered']
    #allocation3 [shape = 's32[1]{0}', space=sflag, size = 0x4, scoped, tag = 'scoped memory for tpu_custom_call.1']
    #allocation4 [shape = 's32[1]{0}', space=sflag, size = 0x4, scoped, tag = 'scoped memory for tpu_custom_call.1']
    #allocation5 [shape = 'u8[8192]{0}', space=vmem, size = 0x2000, scoped, tag = 'input window, operand 1, single buffered']
    #allocation6 [shape = 's32[1]{0}', space=sflag, size = 0x4, scoped, tag = 'scoped memory for tpu_custom_call.1']
    #allocation7 [shape = 'u8[8192]{0}', space=vmem, size = 0x2000, scoped, tag = 'output window, operand 0, single buffered']
    #allocation8 [shape = 'u8[8192]{0}', space=vmem, size = 0x2000, scoped, tag = 'output window, operand 1, single buffered']
    #allocation9 [shape = 's32[1]{0}', space=sflag, size = 0x4, scoped, tag = 'scoped memory for tpu_custom_call.1']
    %13 = vsyncpa [#allocation3], 0
    %14 = vsyncpa [#allocation6], 0
    %15 = vsyncpa [#allocation4], 0
    %16 = vsyncpa [#allocation9], 0
    // Predicated region
    $region2: #{tpu_custom_call.1} parent=1 // pred_check
      _
    $region3: #{tpu_custom_call.1} parent=1 // pred_check_branch
      %18 = sbr.rel (0) target = $region5
    $region4: #{tpu_custom_call.1} parent=1 // pred_region
      %s20 = ssub.s32 256, 256
      %21 = vsyncadd [#allocation3], %s20
      %s23 = sshll.u32 [#allocation2], 4
      %s24 = int_to_ptr.vmem [resolvable:$true] %s23
      %26 = dma.hbm_to_vmem [thread:$0]  %s0, 256, %s24, [#allocation3]
    $region5: #{tpu_custom_call.1} parent=1 // pred_fallthru
      _
    // Predicated region
    $region6: #{tpu_custom_call.1} parent=1 // pred_check
      _
    $region7: #{tpu_custom_call.1} parent=1 // pred_check_branch
      %28 = sbr.rel (0) target = $region9
    $region8: #{tpu_custom_call.1} parent=1 // pred_region
      %s30 = ssub.s32 256, 256
      %31 = vsyncadd [#allocation6], %s30
      %s33 = sshll.u32 [#allocation5], 4
      %s34 = int_to_ptr.vmem [resolvable:$true] %s33
      %36 = dma.hbm_to_vmem [thread:$0]  %s1, 256, %s34, [#allocation6]
    $region9: #{tpu_custom_call.1} parent=1 // pred_fallthru
      _
    // Predicated region
    $region10: #{tpu_custom_call.1} parent=1 // pred_check
      _
    $region11: #{tpu_custom_call.1} parent=1 // pred_check_branch
      %38 = sbr.rel (0) target = $region13
    $region12: #{tpu_custom_call.1} parent=1 // pred_region
      _
    $region13: #{tpu_custom_call.1} parent=1 // pred_fallthru
      _
    // Predicated region
    $region14: #{tpu_custom_call.1} parent=1 // pred_check
      _
    $region15: #{tpu_custom_call.1} parent=1 // pred_check_branch
      %40 = sbr.rel (0) target = $region17
    $region16: #{tpu_custom_call.1} parent=1 // pred_region
      _
    $region17: #{tpu_custom_call.1} parent=1 // pred_fallthru
      _
    // Predicated region
    $region18: #{tpu_custom_call.1} parent=1 // pred_check
      _
    $region19: #{tpu_custom_call.1} parent=1 // pred_check_branch
      %42 = sbr.rel (0) target = $region21
    $region20: #{tpu_custom_call.1} parent=1 // pred_region
      _
    $region21: #{tpu_custom_call.1} parent=1 // pred_fallthru
      _
    // Predicated region
    $region22: #{tpu_custom_call.1} parent=1 // pred_check
      _
    $region23: #{tpu_custom_call.1} parent=1 // pred_check_branch
      %44 = sbr.rel (0) target = $region25
    $region24: #{tpu_custom_call.1} parent=1 // pred_region
      _
    $region25: #{tpu_custom_call.1} parent=1 // pred_fallthru
      _
    // Predicated region
    $region26: #{tpu_custom_call.1} parent=1 // pred_check
      _
    $region27: #{tpu_custom_call.1} parent=1 // pred_check_branch
      %46 = sbr.rel (0) target = $region29
    $region28: #{tpu_custom_call.1} parent=1 // pred_region
      %47 = dma.done [#allocation3], 256
    $region29: #{tpu_custom_call.1} parent=1 // pred_fallthru
      _
    // Predicated region
    $region30: #{tpu_custom_call.1} parent=1 // pred_check
      _
    $region31: #{tpu_custom_call.1} parent=1 // pred_check_branch
      %49 = sbr.rel (0) target = $region33
    $region32: #{tpu_custom_call.1} parent=1 // pred_region
      %50 = dma.done [#allocation6], 256
    $region33: #{tpu_custom_call.1} parent=1 // pred_fallthru
      _
    %v51 = vld [vmem:[#allocation2] sm:$0xff]
    %v52 = vld [vmem:[#allocation2 + $0x8] sm:$0xff]
    %v53 = vld [vmem:[%s2] sm:$0xff]
    %v54 = vld [vmem:[%s3] sm:$0xff]
    %v55 = vadd.f32 %v51, %v52
    %56 = vadd.xlane.f32.xlu0 %v55
    %v57 = vpop.xlane.xlu0 %56
    %v58 = vmul.f32 %v51, %v51
    %v59 = vmul.f32 %v52, %v52
    %v60 = vadd.f32 %v58, %v59
    %61 = vadd.xlane.f32.xlu0 %v60
    %v62 = vpop.xlane.xlu0 %61
    %v63 = vmul.f32 %v57, 0.00390625
    %v64 = vmul.f32 %v62, 0.00390625
    %v65 = vmul.f32 %v63, %v63
    %v66 = vsub.f32 %v64, %v65
    %v67 = vadd.f32 %v66, 1e-05
    %v68 = vrsqrt.pop %v67
    %v69 = vmul.f32 %v68, %v53
    %v70 = vmul.f32 %v63, %v69
    %v71 = vsub.f32 %v54, %v70
    %73 = vset.pattern.permute.xlu0 0
    %74 = vperm.xlu0 %73, %v69
    %v75 = vpop.permute.xlu0 %74
    %v77 = vmul.f32 %v51, %v75
    %v78 = vmul.f32 %v52, %v75
    %80 = vset.pattern.permute.xlu0 0
    %81 = vperm.xlu0 %80, %v71
    %v82 = vpop.permute.xlu0 %81
    %v84 = vadd.f32 %v77, %v82
    %v85 = vadd.f32 %v78, %v82
    %86 = vst [vmem:[#allocation7] sm:$0xff] %v84
    %87 = vst [vmem:[#allocation7 + $0x8] sm:$0xff] %v85
    %v88 = vld [vmem:[#allocation5] sm:$0xff]
    %v89 = vld [vmem:[#allocation5 + $0x8] sm:$0xff]
    %v90 = vld [vmem:[%s4] sm:$0xff]
    %v91 = vld [vmem:[%s5] sm:$0xff]
    %v92 = vadd.f32 %v88, %v89
    %93 = vadd.xlane.f32.xlu0 %v92
    %v94 = vpop.xlane.xlu0 %93
    %v95 = vmul.f32 %v88, %v88
    %v96 = vmul.f32 %v89, %v89
    %v97 = vadd.f32 %v95, %v96
    %98 = vadd.xlane.f32.xlu0 %v97
    %v99 = vpop.xlane.xlu0 %98
    %v100 = vmul.f32 %v94, 0.00390625
    %v101 = vmul.f32 %v99, 0.00390625
    %v102 = vmul.f32 %v100, %v100
    %v103 = vsub.f32 %v101, %v102
    %v104 = vadd.f32 %v103, 1e-05
    %v105 = vrsqrt.pop %v104
    %v106 = vmul.f32 %v105, %v90
    %v107 = vmul.f32 %v100, %v106
    %v108 = vsub.f32 %v91, %v107
    %110 = vset.pattern.permute.xlu0 0
    %111 = vperm.xlu0 %110, %v106
    %v112 = vpop.permute.xlu0 %111
    %v114 = vmul.f32 %v88, %v112
    %v115 = vmul.f32 %v89, %v112
    %117 = vset.pattern.permute.xlu0 0
    %118 = vperm.xlu0 %117, %v108
    %v119 = vpop.permute.xlu0 %118
    %v121 = vadd.f32 %v114, %v119
    %v122 = vadd.f32 %v115, %v119
    %123 = vst [vmem:[#allocation8] sm:$0xff] %v121
    %124 = vst [vmem:[#allocation8 + $0x8] sm:$0xff] %v122
    // Predicated region
    $region34: #{tpu_custom_call.1} parent=1 // pred_check
      _
    $region35: #{tpu_custom_call.1} parent=1 // pred_check_branch
      %126 = sbr.rel (0) target = $region37
    $region36: #{tpu_custom_call.1} parent=1 // pred_region
      %s128 = ssub.s32 256, 256
      %129 = vsyncadd [#allocation4], %s128
      %s131 = sshll.u32 [#allocation7], 4
      %s132 = int_to_ptr.vmem [resolvable:$true] %s131
      %134 = dma.vmem_to_hbm [thread:$0]  %s132, 256, %s6, [#allocation4]
    $region37: #{tpu_custom_call.1} parent=1 // pred_fallthru
      _
    // Predicated region
    $region38: #{tpu_custom_call.1} parent=1 // pred_check
      _
    $region39: #{tpu_custom_call.1} parent=1 // pred_check_branch
      %136 = sbr.rel (0) target = $region41
    $region40: #{tpu_custom_call.1} parent=1 // pred_region
      %s138 = ssub.s32 256, 256
      %139 = vsyncadd [#allocation9], %s138
      %s141 = sshll.u32 [#allocation8], 4
      %s142 = int_to_ptr.vmem [resolvable:$true] %s141
      %144 = dma.vmem_to_hbm [thread:$0]  %s142, 256, %s7, [#allocation9]
    $region41: #{tpu_custom_call.1} parent=1 // pred_fallthru
      _
    // Predicated region
    $region42: #{tpu_custom_call.1} parent=1 // pred_check
      _
    $region43: #{tpu_custom_call.1} parent=1 // pred_check_branch
      %146 = sbr.rel (0) target = $region45
    $region44: #{tpu_custom_call.1} parent=1 // pred_region
      %147 = dma.done [#allocation4], 256
    $region45: #{tpu_custom_call.1} parent=1 // pred_fallthru
      _
    // Predicated region
    $region46: #{tpu_custom_call.1} parent=1 // pred_check
      _
    $region47: #{tpu_custom_call.1} parent=1 // pred_check_branch
      %149 = sbr.rel (0) target = $region49
    $region48: #{tpu_custom_call.1} parent=1 // pred_region
      %150 = dma.done [#allocation9], 256
    $region49: #{tpu_custom_call.1} parent=1 // pred_fallthru
      _
    %151 = vsyncpa [#allocation3], 1
    %152 = vsyncpa [#allocation6], 1
    %153 = vsyncpa [#allocation4], 1
    %154 = vsyncpa [#allocation9], 1

</llo_original>
